<compile_context>
chip_gen: v6e
topology: v6e:2x2x1
jax: 0.10.0
libtpu: 0.0.40
codegen_flags: <defaults>
</compile_context>

<pallas_src>
import functools

import jax
import jax.numpy as jnp
from jax.experimental import pallas as pl
from jax.experimental.pallas import tpu as pltpu


def actor_kernel(x_ref, w1_ref, b1_ref, w2_ref, b2_ref, w3_ref, b3_ref, o_ref,
                 *, in_dim, action_dim):
    """Fused MLP + softmax over one (tb, in_dim) batch tile."""
    x = x_ref[...]
    w1 = w1_ref[...]

    # Layer 1: K = in_dim (tiny) -> unrolled broadcast-FMAs on the VPU instead of the MXU.
    h1 = x[:, 0:1] * w1[0:1, :]
    for k in range(1, in_dim):
        h1 = h1 + x[:, k:k + 1] * w1[k:k + 1, :]
    h1 = jnp.maximum(h1 + b1_ref[...], 0.0)

    # Layer 2: 64x64 -> MXU.
    h2 = jnp.dot(h1, w2_ref[...], preferred_element_type=jnp.float32) + b2_ref[...]
    h2 = jnp.maximum(h2, 0.0)

    # Layer 3: 64 -> action_dim logits.
    logits = jnp.dot(h2, w3_ref[...], preferred_element_type=jnp.float32) + b3_ref[...]

    if action_dim == 2:
        # 2-way softmax as a sigmoid: pure VPU/EUP, no cross-lane reduce, no masking.
        d = logits[:, 1:2] - logits[:, 0:1]
        p0 = 1.0 / (1.0 + jnp.exp(d))          # exp overflow -> inf -> p0 = 0 (correct limit)
        o_ref[:, 0:1] = p0.astype(o_ref.dtype)
        o_ref[:, 1:2] = (1.0 - p0).astype(o_ref.dtype)
    else:
        # General numerically-stable softmax over the (unpadded) action columns.
        m = jnp.max(logits, axis=-1, keepdims=True)
        e = jnp.exp(logits - m)
        o_ref[...] = (e / jnp.sum(e, axis=-1, keepdims=True)).astype(o_ref.dtype)


def _round_up(v, m):
    return (v + m - 1) // m * m


def _choose_tiles(B, tile_b):
    """Pick (tb, b_pad): >=2 tiles when possible (v7x megacore), short grid otherwise."""
    b8 = _round_up(B, 8)
    if b8 <= 8:
        return b8, b8
    tb = min(tile_b, _round_up(pl.cdiv(b8, 2), 8))
    b_pad = _round_up(b8, tb)
    return tb, b_pad


def actor_forward(x, params, *, tile_b=2048):
    """Batched forward: pads batch to the tile grid, runs the gridded Pallas kernel."""
    w1, b1, w2, b2, w3, b3 = params
    B, in_dim = x.shape
    hidden = w1.shape[1]
    action_dim = w3.shape[1]

    tb, b_pad = _choose_tiles(B, tile_b)
    if b_pad != B:
        x = jnp.pad(x, ((0, b_pad - B), (0, 0)))

    kernel = functools.partial(actor_kernel, in_dim=in_dim, action_dim=action_dim)

    out = pl.pallas_call(
        kernel,
        out_shape=jax.ShapeDtypeStruct((b_pad, action_dim), jnp.float32),
        grid=(b_pad // tb,),
        in_specs=[
            pl.BlockSpec((tb, in_dim), lambda i: (i, 0)),           # x: streamed per batch tile
            pl.BlockSpec((in_dim, hidden), lambda i: (0, 0)),       # w1: VMEM-resident
            pl.BlockSpec((1, hidden), lambda i: (0, 0)),            # b1
            pl.BlockSpec((hidden, hidden), lambda i: (0, 0)),       # w2
            pl.BlockSpec((1, hidden), lambda i: (0, 0)),            # b2
            pl.BlockSpec((hidden, action_dim), lambda i: (0, 0)),   # w3 (unpadded)
            pl.BlockSpec((1, action_dim), lambda i: (0, 0)),        # b3 (unpadded)
        ],
        out_specs=pl.BlockSpec((tb, action_dim), lambda i: (i, 0)),  # direct (tb, action_dim) store
        compiler_params=pltpu.CompilerParams(
            dimension_semantics=("parallel",)),
    )(x, w1, b1, w2, b2, w3, b3)

    return out[:B] if b_pad != B else out


def init_params(key, in_dim=5, hidden=64, action_dim=2):
    """Deterministic init mimicking nn.Linear's uniform(-1/sqrt(in), 1/sqrt(in))."""
    ks = jax.random.split(key, 6)

    def linear(kw, kb, fan_in, fan_out):
        bound = 1.0 / jnp.sqrt(jnp.float32(fan_in))
        w = jax.random.uniform(kw, (fan_in, fan_out), jnp.float32, -bound, bound)
        b = jax.random.uniform(kb, (1, fan_out), jnp.float32, -bound, bound)
        return w, b

    w1, b1 = linear(ks[0], ks[1], in_dim, hidden)
    w2, b2 = linear(ks[2], ks[3], hidden, hidden)
    w3, b3 = linear(ks[4], ks[5], hidden, action_dim)
    return (w1, b1, w2, b2, w3, b3)


def reference_forward(x, params):
    w1, b1, w2, b2, w3, b3 = params
    h1 = jax.nn.relu(x @ w1 + b1)
    h2 = jax.nn.relu(h1 @ w2 + b2)
    return jax.nn.softmax(h2 @ w3 + b3, axis=-1)


if __name__ == "__main__":
    key = jax.random.PRNGKey(0)
    k_params, k_x = jax.random.split(key)

    B, IN_DIM, HIDDEN, ACTION_DIM = 64, 5, 64, 2
    params = init_params(k_params, IN_DIM, HIDDEN, ACTION_DIM)
    x = jax.random.normal(k_x, (B, IN_DIM), jnp.float32)

    fwd = jax.jit(actor_forward)
    out = jax.block_until_ready(fwd(x, params))

    ref = reference_forward(x, params)
    assert out.shape == (B, ACTION_DIM), out.shape
    assert jnp.allclose(out.sum(-1), 1.0, atol=1e-4), "softmax rows do not sum to 1"
    assert jnp.allclose(out, ref, atol=1e-4, rtol=1e-4), "mismatch vs reference"

    print("KERNEL_OK")
</pallas_src>

<mosaic_0001>
module attributes {stable_mosaic.version = 11 : i64} {
  func.func @actor_kernel(%arg0: i32, %arg1: memref<32x5xf32, #tpu.memory_space<vmem>>, %arg2: memref<5x64xf32, #tpu.memory_space<vmem>>, %arg3: memref<1x64xf32, #tpu.memory_space<vmem>>, %arg4: memref<64x64xf32, #tpu.memory_space<vmem>>, %arg5: memref<1x64xf32, #tpu.memory_space<vmem>>, %arg6: memref<64x2xf32, #tpu.memory_space<vmem>>, %arg7: memref<1x2xf32, #tpu.memory_space<vmem>>, %arg8: memref<32x2xf32, #tpu.memory_space<vmem>>) attributes {dimension_semantics = [#tpu.dimension_semantics<parallel>], iteration_bounds = array<i64: 2>, scalar_prefetch = 0 : i64, scratch_operands = 0 : i64, tpu.core_type = #tpu.core_type<tc>, window_params = [{transform_indices = @transform_0, window_bounds = array<i64: 32, 5>}, {pipeline_mode = #tpu.pipeline_mode<synchronous>, transform_indices = @transform_1, window_bounds = array<i64: 5, 64>}, {pipeline_mode = #tpu.pipeline_mode<synchronous>, transform_indices = @transform_2, window_bounds = array<i64: 1, 64>}, {pipeline_mode = #tpu.pipeline_mode<synchronous>, transform_indices = @transform_3, window_bounds = array<i64: 64, 64>}, {pipeline_mode = #tpu.pipeline_mode<synchronous>, transform_indices = @transform_4, window_bounds = array<i64: 1, 64>}, {pipeline_mode = #tpu.pipeline_mode<synchronous>, transform_indices = @transform_5, window_bounds = array<i64: 64, 2>}, {pipeline_mode = #tpu.pipeline_mode<synchronous>, transform_indices = @transform_6, window_bounds = array<i64: 1, 2>}, {transform_indices = @transform_7, window_bounds = array<i64: 32, 2>}]} {
    %c0 = arith.constant 0 : index
    %c0_0 = arith.constant 0 : index
    %0 = vector.load %arg1[%c0, %c0_0] : memref<32x5xf32, #tpu.memory_space<vmem>>, vector<32x5xf32>
    %c0_1 = arith.constant 0 : index
    %c0_2 = arith.constant 0 : index
    %1 = vector.load %arg2[%c0_1, %c0_2] : memref<5x64xf32, #tpu.memory_space<vmem>>, vector<5x64xf32>
    %2 = vector.extract_strided_slice %0 {offsets = [0, 0], sizes = [32, 1], strides = [1, 1]} : vector<32x5xf32> to vector<32x1xf32>
    %3 = vector.extract_strided_slice %1 {offsets = [0, 0], sizes = [1, 64], strides = [1, 1]} : vector<5x64xf32> to vector<1x64xf32>
    %4 = vector.broadcast %2 : vector<32x1xf32> to vector<32x64xf32>
    %5 = vector.broadcast %3 : vector<1x64xf32> to vector<32x64xf32>
    %6 = arith.mulf %4, %5 : vector<32x64xf32>
    %7 = vector.extract_strided_slice %0 {offsets = [0, 1], sizes = [32, 1], strides = [1, 1]} : vector<32x5xf32> to vector<32x1xf32>
    %8 = vector.extract_strided_slice %1 {offsets = [1, 0], sizes = [1, 64], strides = [1, 1]} : vector<5x64xf32> to vector<1x64xf32>
    %9 = vector.broadcast %7 : vector<32x1xf32> to vector<32x64xf32>
    %10 = vector.broadcast %8 : vector<1x64xf32> to vector<32x64xf32>
    %11 = arith.mulf %9, %10 : vector<32x64xf32>
    %12 = arith.addf %6, %11 : vector<32x64xf32>
    %13 = vector.extract_strided_slice %0 {offsets = [0, 2], sizes = [32, 1], strides = [1, 1]} : vector<32x5xf32> to vector<32x1xf32>
    %14 = vector.extract_strided_slice %1 {offsets = [2, 0], sizes = [1, 64], strides = [1, 1]} : vector<5x64xf32> to vector<1x64xf32>
    %15 = vector.broadcast %13 : vector<32x1xf32> to vector<32x64xf32>
    %16 = vector.broadcast %14 : vector<1x64xf32> to vector<32x64xf32>
    %17 = arith.mulf %15, %16 : vector<32x64xf32>
    %18 = arith.addf %12, %17 : vector<32x64xf32>
    %19 = vector.extract_strided_slice %0 {offsets = [0, 3], sizes = [32, 1], strides = [1, 1]} : vector<32x5xf32> to vector<32x1xf32>
    %20 = vector.extract_strided_slice %1 {offsets = [3, 0], sizes = [1, 64], strides = [1, 1]} : vector<5x64xf32> to vector<1x64xf32>
    %21 = vector.broadcast %19 : vector<32x1xf32> to vector<32x64xf32>
    %22 = vector.broadcast %20 : vector<1x64xf32> to vector<32x64xf32>
    %23 = arith.mulf %21, %22 : vector<32x64xf32>
    %24 = arith.addf %18, %23 : vector<32x64xf32>
    %25 = vector.extract_strided_slice %0 {offsets = [0, 4], sizes = [32, 1], strides = [1, 1]} : vector<32x5xf32> to vector<32x1xf32>
    %26 = vector.extract_strided_slice %1 {offsets = [4, 0], sizes = [1, 64], strides = [1, 1]} : vector<5x64xf32> to vector<1x64xf32>
    %27 = vector.broadcast %25 : vector<32x1xf32> to vector<32x64xf32>
    %28 = vector.broadcast %26 : vector<1x64xf32> to vector<32x64xf32>
    %29 = arith.mulf %27, %28 : vector<32x64xf32>
    %30 = arith.addf %24, %29 : vector<32x64xf32>
    %c0_3 = arith.constant 0 : index
    %c0_4 = arith.constant 0 : index
    %31 = vector.load %arg3[%c0_3, %c0_4] : memref<1x64xf32, #tpu.memory_space<vmem>>, vector<1x64xf32>
    %32 = vector.broadcast %31 : vector<1x64xf32> to vector<32x64xf32>
    %33 = arith.addf %30, %32 : vector<32x64xf32>
    %cst = arith.constant 0.000000e+00 : f32
    %34 = vector.broadcast %cst : f32 to vector<32x64xf32>
    %35 = arith.maximumf %33, %34 : vector<32x64xf32>
    %c0_5 = arith.constant 0 : index
    %c0_6 = arith.constant 0 : index
    %36 = vector.load %arg4[%c0_5, %c0_6] : memref<64x64xf32, #tpu.memory_space<vmem>>, vector<64x64xf32>
    %cst_7 = arith.constant dense<0.000000e+00> : vector<32x64xf32>
    %37 = tpu.matmul %35, %36, %cst_7 {dimension_numbers = #tpu.dot_dimension_numbers<[1], [0], [0], [1], [0, 0, 1, 1], [], []>} : vector<32x64xf32>, vector<64x64xf32>, vector<32x64xf32> -> vector<32x64xf32>
    %c0_8 = arith.constant 0 : index
    %c0_9 = arith.constant 0 : index
    %38 = vector.load %arg5[%c0_8, %c0_9] : memref<1x64xf32, #tpu.memory_space<vmem>>, vector<1x64xf32>
    %39 = vector.broadcast %38 : vector<1x64xf32> to vector<32x64xf32>
    %40 = arith.addf %37, %39 : vector<32x64xf32>
    %cst_10 = arith.constant 0.000000e+00 : f32
    %41 = vector.broadcast %cst_10 : f32 to vector<32x64xf32>
    %42 = arith.maximumf %40, %41 : vector<32x64xf32>
    %c0_11 = arith.constant 0 : index
    %c0_12 = arith.constant 0 : index
    %43 = vector.load %arg6[%c0_11, %c0_12] : memref<64x2xf32, #tpu.memory_space<vmem>>, vector<64x2xf32>
    %cst_13 = arith.constant dense<0.000000e+00> : vector<32x2xf32>
    %44 = tpu.matmul %42, %43, %cst_13 {dimension_numbers = #tpu.dot_dimension_numbers<[1], [0], [0], [1], [0, 0, 1, 1], [], []>} : vector<32x64xf32>, vector<64x2xf32>, vector<32x2xf32> -> vector<32x2xf32>
    %c0_14 = arith.constant 0 : index
    %c0_15 = arith.constant 0 : index
    %45 = vector.load %arg7[%c0_14, %c0_15] : memref<1x2xf32, #tpu.memory_space<vmem>>, vector<1x2xf32>
    %46 = vector.broadcast %45 : vector<1x2xf32> to vector<32x2xf32>
    %47 = arith.addf %44, %46 : vector<32x2xf32>
    %48 = vector.extract_strided_slice %47 {offsets = [0, 1], sizes = [32, 1], strides = [1, 1]} : vector<32x2xf32> to vector<32x1xf32>
    %49 = vector.extract_strided_slice %47 {offsets = [0, 0], sizes = [32, 1], strides = [1, 1]} : vector<32x2xf32> to vector<32x1xf32>
    %50 = arith.subf %48, %49 : vector<32x1xf32>
    %51 = math.exp %50 : vector<32x1xf32>
    %cst_16 = arith.constant 1.000000e+00 : f32
    %52 = vector.broadcast %cst_16 : f32 to vector<32x1xf32>
    %53 = arith.addf %52, %51 : vector<32x1xf32>
    %cst_17 = arith.constant 1.000000e+00 : f32
    %54 = vector.broadcast %cst_17 : f32 to vector<32x1xf32>
    %55 = arith.divf %54, %53 : vector<32x1xf32>
    %c0_18 = arith.constant 0 : index
    %c0_19 = arith.constant 0 : index
    %56 = vector.load %arg8[%c0_18, %c0_19] : memref<32x2xf32, #tpu.memory_space<vmem>>, vector<32x1xf32>
    tpu.vector_store %arg8[%c0_18, %c0_19], %55 {strides = array<i32>} : memref<32x2xf32, #tpu.memory_space<vmem>>, vector<32x1xf32>,
    %cst_20 = arith.constant 1.000000e+00 : f32
    %57 = vector.broadcast %cst_20 : f32 to vector<32x1xf32>
    %58 = arith.subf %57, %55 : vector<32x1xf32>
    %c0_21 = arith.constant 0 : index
    %c1 = arith.constant 1 : index
    %59 = vector.load %arg8[%c0_21, %c1] : memref<32x2xf32, #tpu.memory_space<vmem>>, vector<32x1xf32>
    tpu.vector_store %arg8[%c0_21, %c1], %58 {strides = array<i32>} : memref<32x2xf32, #tpu.memory_space<vmem>>, vector<32x1xf32>,
    return
  }
  func.func @transform_0(%arg0: i32) -> (i32, i32) {
    %c0_i32 = arith.constant 0 : i32
    %c0_i32_0 = arith.constant 0 : i32
    return %arg0, %c0_i32 : i32, i32
  }
  func.func @transform_1(%arg0: i32) -> (i32, i32) {
    %c0_i32 = arith.constant 0 : i32
    %c0_i32_0 = arith.constant 0 : i32
    %c0_i32_1 = arith.constant 0 : i32
    return %c0_i32, %c0_i32_0 : i32, i32
  }
  func.func @transform_2(%arg0: i32) -> (i32, i32) {
    %c0_i32 = arith.constant 0 : i32
    %c0_i32_0 = arith.constant 0 : i32
    %c0_i32_1 = arith.constant 0 : i32
    return %c0_i32, %c0_i32_0 : i32, i32
  }
  func.func @transform_3(%arg0: i32) -> (i32, i32) {
    %c0_i32 = arith.constant 0 : i32
    %c0_i32_0 = arith.constant 0 : i32
    %c0_i32_1 = arith.constant 0 : i32
    return %c0_i32, %c0_i32_0 : i32, i32
  }
  func.func @transform_4(%arg0: i32) -> (i32, i32) {
    %c0_i32 = arith.constant 0 : i32
    %c0_i32_0 = arith.constant 0 : i32
    %c0_i32_1 = arith.constant 0 : i32
    return %c0_i32, %c0_i32_0 : i32, i32
  }
  func.func @transform_5(%arg0: i32) -> (i32, i32) {
    %c0_i32 = arith.constant 0 : i32
    %c0_i32_0 = arith.constant 0 : i32
    %c0_i32_1 = arith.constant 0 : i32
    return %c0_i32, %c0_i32_0 : i32, i32
  }
  func.func @transform_6(%arg0: i32) -> (i32, i32) {
    %c0_i32 = arith.constant 0 : i32
    %c0_i32_0 = arith.constant 0 : i32
    %c0_i32_1 = arith.constant 0 : i32
    return %c0_i32, %c0_i32_0 : i32, i32
  }
  func.func @transform_7(%arg0: i32) -> (i32, i32) {
    %c0_i32 = arith.constant 0 : i32
    %c0_i32_0 = arith.constant 0 : i32
    return %arg0, %c0_i32 : i32, i32
  }
}

</mosaic_0001>

<llo_original>
// kernel: actor_forward.1
$region0: #{actor_forward.1}
  #allocation0 [shape = 'u32[]', space=smem, size = 0x4, offset = 0x4, fixed_abs, tag = 'smem constant byte address 0x4 - core index']
  #allocation1 [shape = 'u32[144,128]{1,0:T(1,128)}', space=vmem, size = 0x12000, scoped, tag = 'internal scratch']
  %s0 = inlined_call_operand.vmem [shape: f32[64,5], index: 0, kind: input, shape index: {}]
  %s1 = inlined_call_operand.vmem [shape: f32[5,64], index: 1, kind: input, shape index: {}]
  %s2 = inlined_call_operand.vmem [shape: f32[1,64], index: 2, kind: input, shape index: {}]
  %s3 = inlined_call_operand.vmem [shape: f32[64,64], index: 3, kind: input, shape index: {}]
  %s4 = inlined_call_operand.vmem [shape: f32[1,64], index: 4, kind: input, shape index: {}]
  %s5 = inlined_call_operand.vmem [shape: f32[64,2], index: 5, kind: input, shape index: {}]
  %s6 = inlined_call_operand.vmem [shape: f32[1,2], index: 6, kind: input, shape index: {}]
  %s7 = inlined_call_operand.vmem [shape: f32[64,2], index: 7, kind: output, shape index: {}]
  %s8 = sld [smem:[#allocation0]]
  $region61: #{actor_forward.1} parent=0
    _
  %s10 = ssub.s32 1, %s8
  %s11 = scalar_select 0, %s10, %s8
  loop: start=0, step=1, limit=4
  $region2: #{actor_forward.1} parent=0 // loop_pre_header
    _
  $region3: #{actor_forward.1} parent=0 // loop_header
    %s13 = sphi 0, %s17
    %p14 = scmp.ge.s32.totalorder %s13, 4
    %s23 = sphi 0, %s25
    %s26 = sphi 0, %s23
    %s27 = sphi 0, %s26
    %s43 = sphi 0, %s27
    %s47 = sphi 0, %s47
    %s49 = sphi 0, %s47
    %s50 = sphi 0, %s49
    %s64 = sphi 0, %s50
    %s68 = sphi 0, %s68
    %s70 = sphi 0, %s68
    %s71 = sphi 0, %s70
    %s85 = sphi 0, %s71
    %s89 = sphi 0, %s89
    %s91 = sphi 0, %s89
    %s92 = sphi 0, %s91
    %s106 = sphi 0, %s92
    %s110 = sphi 0, %s110
    %s112 = sphi 0, %s110
    %s113 = sphi 0, %s112
    %s127 = sphi 0, %s113
    %s131 = sphi 0, %s131
    %s133 = sphi 0, %s131
    %s134 = sphi 0, %s133
    %s148 = sphi 0, %s134
    %s152 = sphi 0, %s152
    %s154 = sphi 0, %s152
    %s155 = sphi 0, %s154
    %s169 = sphi 0, %s155
    %s175 = sphi 0, %s177
    %s178 = sphi 0, %s175
    %s179 = sphi 0, %s178
    %s195 = sphi 0, %s179
  $region4: #{actor_forward.1} parent=0 // loop_header_branch
    %16 = sbr.rel (%p14) target = $region8
  $region5: #{actor_forward.1} parent=0 // loop_body
    %s18 = ssub.s32 %s13, 1
    %s19 = ssub.s32 %s13, 2
    %s20 = sadd.s32 %s13, 1
    %s21 = ssub.s32 %s13, %s20
    %p22 = scmp.eq.s32.totalorder %s21, 0
    %s24 = sadd.s32 %s23, 1
    %s25 = scalar_select %p22, %s23, %s24
    %p28 = pneg %p22
    %p29 = scmp.eq.s32.totalorder %s13, 1
    %p30 = por %p28, %p29
    %p31 = scmp.ne.s32.totalorder %s23, %s26
    %p32 = scmp.eq.s32.totalorder %s13, 0
    %p33 = por %p31, %p32
    %p34 = scmp.ne.s32.totalorder %s23, %s26
    %p35 = scmp.eq.s32.totalorder %s18, 1
    %p36 = por %p34, %p35
    %p37 = scmp.ne.s32.totalorder %s26, %s27
    %p38 = scmp.eq.s32.totalorder %s18, 0
    %p39 = por %p37, %p38
    %p40 = scmp.ne.s32.totalorder %s26, %s27
    %p41 = scmp.eq.s32.totalorder %s19, 1
    %p42 = por %p40, %p41
    %p44 = scmp.ne.s32.totalorder %s27, %s43
    %p45 = scmp.eq.s32.totalorder %s19, 0
    %p46 = por %p44, %p45
    %s48 = sadd.s32 %s47, 1
    %p51 = scmp.eq.s32.totalorder %s13, 1
    %p52 = scmp.ne.s32.totalorder %s47, %s49
    %p53 = scmp.eq.s32.totalorder %s13, 0
    %p54 = por %p52, %p53
    %p55 = scmp.ne.s32.totalorder %s47, %s49
    %p56 = scmp.eq.s32.totalorder %s18, 1
    %p57 = por %p55, %p56
    %p58 = scmp.ne.s32.totalorder %s49, %s50
    %p59 = scmp.eq.s32.totalorder %s18, 0
    %p60 = por %p58, %p59
    %p61 = scmp.ne.s32.totalorder %s49, %s50
    %p62 = scmp.eq.s32.totalorder %s19, 1
    %p63 = por %p61, %p62
    %p65 = scmp.ne.s32.totalorder %s50, %s64
    %p66 = scmp.eq.s32.totalorder %s19, 0
    %p67 = por %p65, %p66
    %s69 = sadd.s32 %s68, 1
    %p72 = scmp.eq.s32.totalorder %s13, 1
    %p73 = scmp.ne.s32.totalorder %s68, %s70
    %p74 = scmp.eq.s32.totalorder %s13, 0
    %p75 = por %p73, %p74
    %p76 = scmp.ne.s32.totalorder %s68, %s70
    %p77 = scmp.eq.s32.totalorder %s18, 1
    %p78 = por %p76, %p77
    %p79 = scmp.ne.s32.totalorder %s70, %s71
    %p80 = scmp.eq.s32.totalorder %s18, 0
    %p81 = por %p79, %p80
    %p82 = scmp.ne.s32.totalorder %s70, %s71
    %p83 = scmp.eq.s32.totalorder %s19, 1
    %p84 = por %p82, %p83
    %p86 = scmp.ne.s32.totalorder %s71, %s85
    %p87 = scmp.eq.s32.totalorder %s19, 0
    %p88 = por %p86, %p87
    %s90 = sadd.s32 %s89, 1
    %p93 = scmp.eq.s32.totalorder %s13, 1
    %p94 = scmp.ne.s32.totalorder %s89, %s91
    %p95 = scmp.eq.s32.totalorder %s13, 0
    %p96 = por %p94, %p95
    %p97 = scmp.ne.s32.totalorder %s89, %s91
    %p98 = scmp.eq.s32.totalorder %s18, 1
    %p99 = por %p97, %p98
    %p100 = scmp.ne.s32.totalorder %s91, %s92
    %p101 = scmp.eq.s32.totalorder %s18, 0
    %p102 = por %p100, %p101
    %p103 = scmp.ne.s32.totalorder %s91, %s92
    %p104 = scmp.eq.s32.totalorder %s19, 1
    %p105 = por %p103, %p104
    %p107 = scmp.ne.s32.totalorder %s92, %s106
    %p108 = scmp.eq.s32.totalorder %s19, 0
    %p109 = por %p107, %p108
    %s111 = sadd.s32 %s110, 1
    %p114 = scmp.eq.s32.totalorder %s13, 1
    %p115 = scmp.ne.s32.totalorder %s110, %s112
    %p116 = scmp.eq.s32.totalorder %s13, 0
    %p117 = por %p115, %p116
    %p118 = scmp.ne.s32.totalorder %s110, %s112
    %p119 = scmp.eq.s32.totalorder %s18, 1
    %p120 = por %p118, %p119
    %p121 = scmp.ne.s32.totalorder %s112, %s113
    %p122 = scmp.eq.s32.totalorder %s18, 0
    %p123 = por %p121, %p122
    %p124 = scmp.ne.s32.totalorder %s112, %s113
    %p125 = scmp.eq.s32.totalorder %s19, 1
    %p126 = por %p124, %p125
    %p128 = scmp.ne.s32.totalorder %s113, %s127
    %p129 = scmp.eq.s32.totalorder %s19, 0
    %p130 = por %p128, %p129
    %s132 = sadd.s32 %s131, 1
    %p135 = scmp.eq.s32.totalorder %s13, 1
    %p136 = scmp.ne.s32.totalorder %s131, %s133
    %p137 = scmp.eq.s32.totalorder %s13, 0
    %p138 = por %p136, %p137
    %p139 = scmp.ne.s32.totalorder %s131, %s133
    %p140 = scmp.eq.s32.totalorder %s18, 1
    %p141 = por %p139, %p140
    %p142 = scmp.ne.s32.totalorder %s133, %s134
    %p143 = scmp.eq.s32.totalorder %s18, 0
    %p144 = por %p142, %p143
    %p145 = scmp.ne.s32.totalorder %s133, %s134
    %p146 = scmp.eq.s32.totalorder %s19, 1
    %p147 = por %p145, %p146
    %p149 = scmp.ne.s32.totalorder %s134, %s148
    %p150 = scmp.eq.s32.totalorder %s19, 0
    %p151 = por %p149, %p150
    %s153 = sadd.s32 %s152, 1
    %p156 = scmp.eq.s32.totalorder %s13, 1
    %p157 = scmp.ne.s32.totalorder %s152, %s154
    %p158 = scmp.eq.s32.totalorder %s13, 0
    %p159 = por %p157, %p158
    %p160 = scmp.ne.s32.totalorder %s152, %s154
    %p161 = scmp.eq.s32.totalorder %s18, 1
    %p162 = por %p160, %p161
    %p163 = scmp.ne.s32.totalorder %s154, %s155
    %p164 = scmp.eq.s32.totalorder %s18, 0
    %p165 = por %p163, %p164
    %p166 = scmp.ne.s32.totalorder %s154, %s155
    %p167 = scmp.eq.s32.totalorder %s19, 1
    %p168 = por %p166, %p167
    %p170 = scmp.ne.s32.totalorder %s155, %s169
    %p171 = scmp.eq.s32.totalorder %s19, 0
    %p172 = por %p170, %p171
    %s173 = ssub.s32 %s13, %s20
    %p174 = scmp.eq.s32.totalorder %s173, 0
    %s176 = sadd.s32 %s175, 1
    %s177 = scalar_select %p174, %s175, %s176
    %p180 = pneg %p174
    %p181 = scmp.eq.s32.totalorder %s13, 1
    %p182 = por %p180, %p181
    %p183 = scmp.ne.s32.totalorder %s175, %s178
    %p184 = scmp.eq.s32.totalorder %s13, 0
    %p185 = por %p183, %p184
    %p186 = scmp.ne.s32.totalorder %s175, %s178
    %p187 = scmp.eq.s32.totalorder %s18, 1
    %p188 = por %p186, %p187
    %p189 = scmp.ne.s32.totalorder %s178, %s179
    %p190 = scmp.eq.s32.totalorder %s18, 0
    %p191 = por %p189, %p190
    %p192 = scmp.ne.s32.totalorder %s178, %s179
    %p193 = scmp.eq.s32.totalorder %s19, 1
    %p194 = por %p192, %p193
    %p196 = scmp.ne.s32.totalorder %s179, %s195
    %p197 = scmp.eq.s32.totalorder %s19, 0
    %p198 = por %p196, %p197
    %p199 = scmp.le.s32.totalorder 1, %s13
    %p200 = scmp.lt.s32.totalorder %s13, 3
    %p201 = pnand %p199, %p200
    %p202 = pneg %p201
    // Predicated region
    $region9: #{actor_forward.1} parent=5 // pred_check
      _
    $region10: #{actor_forward.1} parent=5 // pred_check_branch
      %204 = sbr.rel (%p201) target = $region12
    $region11: #{actor_forward.1} parent=5 // pred_region
      %s205 = ssub.s32 %s13, 1
      // Predicated region
      $region13: #{actor_forward.1} parent=11 // pred_check
        %p206 = pneg %p60
      $region14: #{actor_forward.1} parent=11 // pred_check_branch
        %208 = sbr.rel (%p206) target = $region16
      $region15: #{actor_forward.1} parent=11 // pred_region
        _
      $region16: #{actor_forward.1} parent=11 // pred_fallthru
        _
      // Predicated region
      $region17: #{actor_forward.1} parent=11 // pred_check
        %p209 = pneg %p81
      $region18: #{actor_forward.1} parent=11 // pred_check_branch
        %211 = sbr.rel (%p209) target = $region20
      $region19: #{actor_forward.1} parent=11 // pred_region
        _
      $region20: #{actor_forward.1} parent=11 // pred_fallthru
        _
      // Predicated region
      $region21: #{actor_forward.1} parent=11 // pred_check
        %p212 = pneg %p102
      $region22: #{actor_forward.1} parent=11 // pred_check_branch
        %214 = sbr.rel (%p212) target = $region24
      $region23: #{actor_forward.1} parent=11 // pred_region
        _
      $region24: #{actor_forward.1} parent=11 // pred_fallthru
        _
      // Predicated region
      $region25: #{actor_forward.1} parent=11 // pred_check
        %p215 = pneg %p123
      $region26: #{actor_forward.1} parent=11 // pred_check_branch
        %217 = sbr.rel (%p215) target = $region28
      $region27: #{actor_forward.1} parent=11 // pred_region
        _
      $region28: #{actor_forward.1} parent=11 // pred_fallthru
        _
      // Predicated region
      $region29: #{actor_forward.1} parent=11 // pred_check
        %p218 = pneg %p144
      $region30: #{actor_forward.1} parent=11 // pred_check_branch
        %220 = sbr.rel (%p218) target = $region32
      $region31: #{actor_forward.1} parent=11 // pred_region
        _
      $region32: #{actor_forward.1} parent=11 // pred_fallthru
        _
      // Predicated region
      $region33: #{actor_forward.1} parent=11 // pred_check
        %p221 = pneg %p165
      $region34: #{actor_forward.1} parent=11 // pred_check_branch
        %223 = sbr.rel (%p221) target = $region36
      $region35: #{actor_forward.1} parent=11 // pred_region
        _
      $region36: #{actor_forward.1} parent=11 // pred_fallthru
        _
    $region12: #{actor_forward.1} parent=5 // pred_fallthru
      _
    %p224 = scmp.lt.s32.totalorder %s13, 2
    // Predicated region
    $region37: #{actor_forward.1} parent=5 // pred_check
      %p225 = pneg %p224
    $region38: #{actor_forward.1} parent=5 // pred_check_branch
      %227 = sbr.rel (%p225) target = $region40
    $region39: #{actor_forward.1} parent=5 // pred_region
      // Predicated region
      $region41: #{actor_forward.1} parent=39 // pred_check
        %p228 = pneg %p33
      $region42: #{actor_forward.1} parent=39 // pred_check_branch
        %230 = sbr.rel (%p228) target = $region44
      $region43: #{actor_forward.1} parent=39 // pred_region
        %s231 = smul.u32 4, %s13
        %p232 = scmp.lt.s32.totalorder %s231, 7
        %s233 = scalar_select %p232, %s231, 7
        %s234 = smul.addr %s233, 8
        %s235 = scalar_lea.vmem %s0, %s234
        %s236 = smul.u32 4, %s13
      $region44: #{actor_forward.1} parent=39 // pred_fallthru
        _
    $region40: #{actor_forward.1} parent=5 // pred_fallthru
      _
    %p237 = scmp.le.s32.totalorder 1, %s13
    %p238 = scmp.lt.s32.totalorder %s13, 3
    %p239 = pnand %p237, %p238
    %p240 = pneg %p239
    // Predicated region
    $region45: #{actor_forward.1} parent=5 // pred_check
      _
    $region46: #{actor_forward.1} parent=5 // pred_check_branch
      %242 = sbr.rel (%p239) target = $region48
    $region47: #{actor_forward.1} parent=5 // pred_region
      %s243 = ssub.s32 %s13, 1
      %s244 = smul.u32 4, %s18
      %p245 = scmp.lt.s32.totalorder %s244, 7
      %s246 = scalar_select %p245, %s244, 7
      %s247 = smul.addr %s246, 8
      %s248 = scalar_lea.vmem %s0, %s247
      %p249 = pneg %p39
      %p250 = pneg %p36
      %p251 = pneg %p60
      %p252 = pneg %p57
      %p253 = pneg %p81
      %p254 = pneg %p78
      %p255 = pneg %p102
      %p256 = pneg %p99
      %p257 = pneg %p123
      %p258 = pneg %p120
      %p259 = pneg %p144
      %p260 = pneg %p141
      %p261 = pneg %p165
      %p262 = pneg %p162
      %p263 = pneg %p191
      %p264 = pneg %p188
      %s265 = smul.u32 4, %s18
      %p266 = scmp.lt.s32.totalorder %s265, 7
      %s267 = scalar_select %p266, %s265, 7
      %s268 = smul.addr %s267, 8
      %s269 = scalar_lea.vmem %s7, %s268
      %s270 = smul.u32 4, %s18
      %p271 = scmp.lt.s32.totalorder %s270, 7
      %s272 = scalar_select %p271, %s270, 7
      %s273 = smul.addr %s272, 8
      %s274 = scalar_lea.vmem %s0, %s273
      %s275 = smul.u32 4, %s18
      %s276 = smul.u32 4, %s18
      %p277 = scmp.lt.s32.totalorder %s276, 7
      %s278 = scalar_select %p277, %s276, 7
      %s279 = smul.addr %s278, 8
      %s280 = scalar_lea.vmem %s7, %s279
      %s281 = smul.u32 4, %s18
      %v282 = vld [vmem:[%s274] sm:$0xff]
      %v283 = vld [vmem:[%s274 + $0x8] sm:$0xff]
      %v284 = vld [vmem:[%s274 + $0x10] sm:$0xff]
      %v285 = vld [vmem:[%s274 + $0x18] sm:$0xff]
      %v286 = vld [vmem:[%s1] sm:$0x1f]
      %288 = vset.pattern.permute.xlu0 0
      %289 = vperm.xlu0 %288, %v282
      %v290 = vpop.permute.xlu0 %289
      %293 = vset.pattern.permute.xlu0 0
      %294 = vperm.xlu0 %293, %v283
      %v295 = vpop.permute.xlu0 %294
      %298 = vset.pattern.permute.xlu0 0
      %299 = vperm.xlu0 %298, %v284
      %v300 = vpop.permute.xlu0 %299
      %303 = vset.pattern.permute.xlu0 0
      %304 = vperm.xlu0 %303, %v285
      %v305 = vpop.permute.xlu0 %304
      %v307 = vlaneseq
      %v308 = vshrl.u32 %v307, 7
      %v309 = vsub.s32 0, %v308
      %v310 = vrot.slane %v286, %v309
      %v311 = vmul.f32 %v290, %v310
      %v312 = vmul.f32 %v295, %v310
      %v313 = vmul.f32 %v300, %v310
      %v314 = vmul.f32 %v305, %v310
      %315 = vset.pattern.permute.xlu0 1
      %316 = vperm.xlu0 %315, %v282
      %v317 = vpop.permute.xlu0 %316
      %319 = vset.pattern.permute.xlu0 1
      %320 = vperm.xlu0 %319, %v283
      %v321 = vpop.permute.xlu0 %320
      %323 = vset.pattern.permute.xlu0 1
      %324 = vperm.xlu0 %323, %v284
      %v325 = vpop.permute.xlu0 %324
      %327 = vset.pattern.permute.xlu0 1
      %328 = vperm.xlu0 %327, %v285
      %v329 = vpop.permute.xlu0 %328
      %v331 = vlaneseq
      %v332 = vshrl.u32 %v331, 7
      %v333 = vsub.s32 1, %v332
      %v334 = vrot.slane %v286, %v333
      %v335 = vmul.f32 %v317, %v334
      %v336 = vmul.f32 %v321, %v334
      %v337 = vmul.f32 %v325, %v334
      %v338 = vmul.f32 %v329, %v334
      %v339 = vadd.f32 %v311, %v335
      %v340 = vadd.f32 %v312, %v336
      %v341 = vadd.f32 %v313, %v337
      %v342 = vadd.f32 %v314, %v338
      %343 = vset.pattern.permute.xlu0 2
      %344 = vperm.xlu0 %343, %v282
      %v345 = vpop.permute.xlu0 %344
      %347 = vset.pattern.permute.xlu0 2
      %348 = vperm.xlu0 %347, %v283
      %v349 = vpop.permute.xlu0 %348
      %351 = vset.pattern.permute.xlu0 2
      %352 = vperm.xlu0 %351, %v284
      %v353 = vpop.permute.xlu0 %352
      %355 = vset.pattern.permute.xlu0 2
      %356 = vperm.xlu0 %355, %v285
      %v357 = vpop.permute.xlu0 %356
      %v359 = vlaneseq
      %v360 = vshrl.u32 %v359, 7
      %v361 = vsub.s32 2, %v360
      %v362 = vrot.slane %v286, %v361
      %v363 = vmul.f32 %v345, %v362
      %v364 = vmul.f32 %v349, %v362
      %v365 = vmul.f32 %v353, %v362
      %v366 = vmul.f32 %v357, %v362
      %v367 = vadd.f32 %v339, %v363
      %v368 = vadd.f32 %v340, %v364
      %v369 = vadd.f32 %v341, %v365
      %v370 = vadd.f32 %v342, %v366
      %371 = vset.pattern.permute.xlu0 3
      %372 = vperm.xlu0 %371, %v282
      %v373 = vpop.permute.xlu0 %372
      %375 = vset.pattern.permute.xlu0 3
      %376 = vperm.xlu0 %375, %v283
      %v377 = vpop.permute.xlu0 %376
      %379 = vset.pattern.permute.xlu0 3
      %380 = vperm.xlu0 %379, %v284
      %v381 = vpop.permute.xlu0 %380
      %383 = vset.pattern.permute.xlu0 3
      %384 = vperm.xlu0 %383, %v285
      %v385 = vpop.permute.xlu0 %384
      %v387 = vlaneseq
      %v388 = vshrl.u32 %v387, 7
      %v389 = vsub.s32 3, %v388
      %v390 = vrot.slane %v286, %v389
      %v391 = vmul.f32 %v373, %v390
      %v392 = vmul.f32 %v377, %v390
      %v393 = vmul.f32 %v381, %v390
      %v394 = vmul.f32 %v385, %v390
      %v395 = vadd.f32 %v367, %v391
      %v396 = vadd.f32 %v368, %v392
      %v397 = vadd.f32 %v369, %v393
      %v398 = vadd.f32 %v370, %v394
      %399 = vset.pattern.permute.xlu0 4
      %400 = vperm.xlu0 %399, %v282
      %v401 = vpop.permute.xlu0 %400
      %403 = vset.pattern.permute.xlu0 4
      %404 = vperm.xlu0 %403, %v283
      %v405 = vpop.permute.xlu0 %404
      %407 = vset.pattern.permute.xlu0 4
      %408 = vperm.xlu0 %407, %v284
      %v409 = vpop.permute.xlu0 %408
      %411 = vset.pattern.permute.xlu0 4
      %412 = vperm.xlu0 %411, %v285
      %v413 = vpop.permute.xlu0 %412
      %v415 = vlaneseq
      %v416 = vshrl.u32 %v415, 7
      %v417 = vsub.s32 4, %v416
      %v418 = vrot.slane %v286, %v417
      %v419 = vmul.f32 %v401, %v418
      %v420 = vmul.f32 %v405, %v418
      %v421 = vmul.f32 %v409, %v418
      %v422 = vmul.f32 %v413, %v418
      %v423 = vadd.f32 %v395, %v419
      %v424 = vadd.f32 %v396, %v420
      %v425 = vadd.f32 %v397, %v421
      %v426 = vadd.f32 %v398, %v422
      %v427 = vld [vmem:[%s2] sm:$0x1]
      %v429 = vlaneseq
      %v430 = vshrl.u32 %v429, 7
      %v431 = vsub.s32 0, %v430
      %v432 = vrot.slane %v427, %v431
      %v434 = vadd.f32 %v423, %v432
      %v435 = vadd.f32 %v424, %v432
      %v436 = vadd.f32 %v425, %v432
      %v437 = vadd.f32 %v426, %v432
      %v438 = vmax.f32 %v434, 0.0
      %v439 = vmax.f32 %v435, 0.0
      %v440 = vmax.f32 %v436, 0.0
      %v441 = vmax.f32 %v437, 0.0
      %v442 = vld [vmem:[%s3] sm:$0xff]
      %v443 = vld [vmem:[%s3 + $0x8] sm:$0xff]
      %v444 = vld [vmem:[%s3 + $0x10] sm:$0xff]
      %v445 = vld [vmem:[%s3 + $0x18] sm:$0xff]
      %v446 = vld [vmem:[%s3 + $0x20] sm:$0xff]
      %v447 = vld [vmem:[%s3 + $0x28] sm:$0xff]
      %v448 = vld [vmem:[%s3 + $0x30] sm:$0xff]
      %v449 = vld [vmem:[%s3 + $0x38] sm:$0xff]
      %v450 = vld [vmem:[%s4] sm:$0x1]
      %v452 = vlaneseq
      %v453 = vshrl.u32 %v452, 7
      %v454 = vsub.s32 0, %v453
      %v455 = vrot.slane %v450, %v454
      %vm457 = vcmask 523264
      %v459 = vsel %vm457, %v438, 0
      %v462 = vsel %vm457, %v439, 0
      %v465 = vsel %vm457, %v440, 0
      %v468 = vsel %vm457, %v441, 0
      %470 = vmatprep.subr.mxu0 0.0
      %471 = vmatpush1.msra.mxu0 0.0
      %472 = vmatprep.subr.mxu0 0.0
      %473 = vmatpush1.msra.mxu0 0.0
      %474 = vmatprep.subr.mxu0 0.0
      %475 = vmatpush1.msra.mxu0 0.0
      %476 = vmatprep.subr.mxu0 0.0
      %477 = vmatpush1.msra.mxu0 0.0
      %478 = vmatprep.subr.mxu0 0.0
      %479 = vmatpush1.msra.mxu0 0.0
      %480 = vmatprep.subr.mxu0 0.0
      %481 = vmatpush1.msra.mxu0 0.0
      %482 = vmatprep.subr.mxu0 0.0
      %483 = vmatpush1.msra.mxu0 0.0
      %484 = vmatprep.subr.mxu0 0.0
      %485 = vmatpush1.msra.mxu0 0.0
      %486 = vmatprep.subr.mxu0 0.0
      %487 = vmatpush1.msra.mxu0 %v449
      %488 = vmatprep.subr.mxu0 0.0
      %489 = vmatpush1.msra.mxu0 %v448
      %490 = vmatprep.subr.mxu0 0.0
      %491 = vmatpush1.msra.mxu0 %v447
      %492 = vmatprep.subr.mxu0 0.0
      %493 = vmatpush1.msra.mxu0 %v446
      %494 = vmatprep.subr.mxu0 0.0
      %495 = vmatpush1.msra.mxu0 %v445
      %496 = vmatprep.subr.mxu0 0.0
      %497 = vmatpush1.msra.mxu0 %v444
      %498 = vmatprep.subr.mxu0 0.0
      %499 = vmatpush1.msra.mxu0 %v443
      %500 = vmatprep.subr.mxu0 0.0
      %501 = vmatpush1.msra.mxu0 %v442
      %502 = vmatprep.subr.mxu0 0.0
      %503 = vmatpush2.msra.mxu0 0.0
      %504 = vmatprep.subr.mxu0 0.0
      %505 = vmatpush2.msra.mxu0 0.0
      %506 = vmatprep.subr.mxu0 0.0
      %507 = vmatpush2.msra.mxu0 0.0
      %508 = vmatprep.subr.mxu0 0.0
      %509 = vmatpush2.msra.mxu0 0.0
      %510 = vmatprep.subr.mxu0 0.0
      %511 = vmatpush2.msra.mxu0 0.0
      %512 = vmatprep.subr.mxu0 0.0
      %513 = vmatpush2.msra.mxu0 0.0
      %514 = vmatprep.subr.mxu0 0.0
      %515 = vmatpush2.msra.mxu0 0.0
      %516 = vmatprep.subr.mxu0 0.0
      %517 = vmatpush2.msra.mxu0 0.0
      %518 = vmatprep.subr.mxu0 0.0
      %519 = vmatpush2.msra.mxu0 0.0
      %520 = vmatprep.subr.mxu0 0.0
      %521 = vmatpush2.msra.mxu0 0.0
      %522 = vmatprep.subr.mxu0 0.0
      %523 = vmatpush2.msra.mxu0 0.0
      %524 = vmatprep.subr.mxu0 0.0
      %525 = vmatpush2.msra.mxu0 0.0
      %526 = vmatprep.subr.mxu0 0.0
      %527 = vmatpush2.msra.mxu0 0.0
      %528 = vmatprep.subr.mxu0 0.0
      %529 = vmatpush2.msra.mxu0 0.0
      %530 = vmatprep.subr.mxu0 0.0
      %531 = vmatpush2.msra.mxu0 0.0
      %532 = vmatprep.subr.mxu0 0.0
      %533 = vmatpush2.msra.mxu0 0.0
      %534 = vmatprep.mubr.f32.mxu0 0.0
      %535 = vmatmul.mubr.f32.gmra.mxu0 %v459
      %v536 = vpop.f32.mrf.mxu0
      %v537 = vadd.f32 %v455, %v536
      %v538 = vpop.f32.mrf.mxu0
      %539 = vmatprep.mubr.f32.mxu0 0.0
      %540 = vmatmul.mubr.f32.gmra.mxu0 %v462
      %v541 = vpop.f32.mrf.mxu0
      %v542 = vadd.f32 %v455, %v541
      %v543 = vpop.f32.mrf.mxu0
      %544 = vmatprep.mubr.f32.mxu0 0.0
      %545 = vmatmul.mubr.f32.gmra.mxu0 %v465
      %v546 = vpop.f32.mrf.mxu0
      %v547 = vadd.f32 %v455, %v546
      %v548 = vpop.f32.mrf.mxu0
      %549 = vmatprep.mubr.f32.mxu0 0.0
      %550 = vmatmul.mubr.f32.gmra.mxu0 %v468
      %v551 = vpop.f32.mrf.mxu0
      %v552 = vadd.f32 %v455, %v551
      %v553 = vpop.f32.mrf.mxu0
      %554 = vdwg.mxu0
      %v555 = vmax.f32 %v537, 0.0
      %v556 = vmax.f32 %v542, 0.0
      %v557 = vmax.f32 %v547, 0.0
      %v558 = vmax.f32 %v552, 0.0
      %v559 = vld [vmem:[%s5] sm:$0xff]
      %v560 = vld [vmem:[%s5 + $0x8] sm:$0xff]
      %v561 = vld [vmem:[%s5 + $0x10] sm:$0xff]
      %v562 = vld [vmem:[%s5 + $0x18] sm:$0xff]
      %v563 = vld [vmem:[%s5 + $0x20] sm:$0xff]
      %v564 = vld [vmem:[%s5 + $0x28] sm:$0xff]
      %v565 = vld [vmem:[%s5 + $0x30] sm:$0xff]
      %v566 = vld [vmem:[%s5 + $0x38] sm:$0xff]
      %v567 = vld [vmem:[%s6] sm:$0x1]
      %v569 = vlaneseq
      %v570 = vshrl.u32 %v569, 7
      %v571 = vsub.s32 0, %v570
      %v572 = vrot.slane %v567, %v571
      %v575 = vsel %vm457, %v555, 0
      %v578 = vsel %vm457, %v556, 0
      %v581 = vsel %vm457, %v557, 0
      %v584 = vsel %vm457, %v558, 0
      %586 = vmatprep.subr.mxu0 0.0
      %587 = vmatpush1.msra.mxu0 0.0
      %588 = vmatprep.subr.mxu0 0.0
      %589 = vmatpush1.msra.mxu0 0.0
      %590 = vmatprep.subr.mxu0 0.0
      %591 = vmatpush1.msra.mxu0 0.0
      %592 = vmatprep.subr.mxu0 0.0
      %593 = vmatpush1.msra.mxu0 0.0
      %594 = vmatprep.subr.mxu0 0.0
      %595 = vmatpush1.msra.mxu0 0.0
      %596 = vmatprep.subr.mxu0 0.0
      %597 = vmatpush1.msra.mxu0 0.0
      %598 = vmatprep.subr.mxu0 0.0
      %599 = vmatpush1.msra.mxu0 0.0
      %600 = vmatprep.subr.mxu0 0.0
      %601 = vmatpush1.msra.mxu0 0.0
      %602 = vmatprep.subr.mxu0 0.0
      %603 = vmatpush1.msra.mxu0 %v566
      %604 = vmatprep.subr.mxu0 0.0
      %605 = vmatpush1.msra.mxu0 %v565
      %606 = vmatprep.subr.mxu0 0.0
      %607 = vmatpush1.msra.mxu0 %v564
      %608 = vmatprep.subr.mxu0 0.0
      %609 = vmatpush1.msra.mxu0 %v563
      %610 = vmatprep.subr.mxu0 0.0
      %611 = vmatpush1.msra.mxu0 %v562
      %612 = vmatprep.subr.mxu0 0.0
      %613 = vmatpush1.msra.mxu0 %v561
      %614 = vmatprep.subr.mxu0 0.0
      %615 = vmatpush1.msra.mxu0 %v560
      %616 = vmatprep.subr.mxu0 0.0
      %617 = vmatpush1.msra.mxu0 %v559
      %618 = vmatprep.subr.mxu0 0.0
      %619 = vmatpush2.msra.mxu0 0.0
      %620 = vmatprep.subr.mxu0 0.0
      %621 = vmatpush2.msra.mxu0 0.0
      %622 = vmatprep.subr.mxu0 0.0
      %623 = vmatpush2.msra.mxu0 0.0
      %624 = vmatprep.subr.mxu0 0.0
      %625 = vmatpush2.msra.mxu0 0.0
      %626 = vmatprep.subr.mxu0 0.0
      %627 = vmatpush2.msra.mxu0 0.0
      %628 = vmatprep.subr.mxu0 0.0
      %629 = vmatpush2.msra.mxu0 0.0
      %630 = vmatprep.subr.mxu0 0.0
      %631 = vmatpush2.msra.mxu0 0.0
      %632 = vmatprep.subr.mxu0 0.0
      %633 = vmatpush2.msra.mxu0 0.0
      %634 = vmatprep.subr.mxu0 0.0
      %635 = vmatpush2.msra.mxu0 0.0
      %636 = vmatprep.subr.mxu0 0.0
      %637 = vmatpush2.msra.mxu0 0.0
      %638 = vmatprep.subr.mxu0 0.0
      %639 = vmatpush2.msra.mxu0 0.0
      %640 = vmatprep.subr.mxu0 0.0
      %641 = vmatpush2.msra.mxu0 0.0
      %642 = vmatprep.subr.mxu0 0.0
      %643 = vmatpush2.msra.mxu0 0.0
      %644 = vmatprep.subr.mxu0 0.0
      %645 = vmatpush2.msra.mxu0 0.0
      %646 = vmatprep.subr.mxu0 0.0
      %647 = vmatpush2.msra.mxu0 0.0
      %648 = vmatprep.subr.mxu0 0.0
      %649 = vmatpush2.msra.mxu0 0.0
      %650 = vmatprep.mubr.f32.mxu0 0.0
      %651 = vmatmul.mubr.f32.gmra.mxu0 %v575
      %v652 = vpop.f32.mrf.mxu0
      %v653 = vadd.f32 %v572, %v652
      %v654 = vpop.f32.mrf.mxu0
      %655 = vmatprep.mubr.f32.mxu0 0.0
      %656 = vmatmul.mubr.f32.gmra.mxu0 %v578
      %v657 = vpop.f32.mrf.mxu0
      %v658 = vadd.f32 %v572, %v657
      %v659 = vpop.f32.mrf.mxu0
      %660 = vmatprep.mubr.f32.mxu0 0.0
      %661 = vmatmul.mubr.f32.gmra.mxu0 %v581
      %v662 = vpop.f32.mrf.mxu0
      %v663 = vadd.f32 %v572, %v662
      %v664 = vpop.f32.mrf.mxu0
      %665 = vmatprep.mubr.f32.mxu0 0.0
      %666 = vmatmul.mubr.f32.gmra.mxu0 %v584
      %v667 = vpop.f32.mrf.mxu0
      %v668 = vadd.f32 %v572, %v667
      %v669 = vpop.f32.mrf.mxu0
      %670 = vdwg.mxu0
      %675 = vrot.lane.b32.xlu0 %v653, 1
      %v676 = vpop.permute.xlu0 %675
      %677 = vrot.lane.b32.xlu0 %v658, 1
      %v678 = vpop.permute.xlu0 %677
      %679 = vrot.lane.b32.xlu0 %v663, 1
      %v680 = vpop.permute.xlu0 %679
      %681 = vrot.lane.b32.xlu0 %v668, 1
      %v682 = vpop.permute.xlu0 %681
      %v687 = vsub.f32 %v653, %v676
      %v688 = vsub.f32 %v658, %v678
      %v689 = vsub.f32 %v663, %v680
      %v690 = vsub.f32 %v668, %v682
      %v691 = vmul.f32 %v687, 1.442695
      %v692 = vpow.pop %v691
      %v693 = vmul.f32 %v688, 1.442695
      %v694 = vpow.pop %v693
      %v695 = vmul.f32 %v689, 1.442695
      %v696 = vpow.pop %v695
      %v697 = vmul.f32 %v690, 1.442695
      %v698 = vpow.pop %v697
      %v699 = vadd.f32 %v692, 1.0
      %v700 = vadd.f32 %v694, 1.0
      %v701 = vadd.f32 %v696, 1.0
      %v702 = vadd.f32 %v698, 1.0
      %v703 = vrcp.pop %v699
      %v704 = vmul.f32 1.0, %v703
      %v705 = vrcp.pop %v700
      %v706 = vmul.f32 1.0, %v705
      %v707 = vrcp.pop %v701
      %v708 = vmul.f32 1.0, %v707
      %v709 = vrcp.pop %v702
      %v710 = vmul.f32 1.0, %v709
      %715 = vrot.lane.b32.xlu0 %v704, 127
      %v716 = vpop.permute.xlu0 %715
      %717 = vrot.lane.b32.xlu0 %v706, 127
      %v718 = vpop.permute.xlu0 %717
      %719 = vrot.lane.b32.xlu0 %v708, 127
      %v720 = vpop.permute.xlu0 %719
      %721 = vrot.lane.b32.xlu0 %v710, 127
      %v722 = vpop.permute.xlu0 %721
      %vm727 = vcmask 7168
      %728 = vst.msk [vmem:[%s280] sm:$0xff] %vm727, %v716
      %729 = vst.msk [vmem:[%s280 + $0x8] sm:$0xff] %vm727, %v718
      %730 = vst.msk [vmem:[%s280 + $0x10] sm:$0xff] %vm727, %v720
      %731 = vst.msk [vmem:[%s280 + $0x18] sm:$0xff] %vm727, %v722
      %v732 = vsub.f32 1.0, %v704
      %v733 = vsub.f32 1.0, %v706
      %v734 = vsub.f32 1.0, %v708
      %v735 = vsub.f32 1.0, %v710
      %vm736 = vcmask 15368
      %737 = vst.msk [vmem:[%s280] sm:$0xff] %vm736, %v732
      %738 = vst.msk [vmem:[%s280 + $0x8] sm:$0xff] %vm736, %v733
      %739 = vst.msk [vmem:[%s280 + $0x10] sm:$0xff] %vm736, %v734
      %740 = vst.msk [vmem:[%s280 + $0x18] sm:$0xff] %vm736, %v735
      %s741 = smul.u32 4, %s18
      %p742 = scmp.lt.s32.totalorder %s741, 7
      %s743 = scalar_select %p742, %s741, 7
      %s744 = smul.addr %s743, 8
      %s745 = scalar_lea.vmem %s7, %s744
      // Predicated region
      $region49: #{actor_forward.1} parent=47 // pred_check
        %p746 = pneg %p188
      $region50: #{actor_forward.1} parent=47 // pred_check_branch
        %748 = sbr.rel (%p746) target = $region52
      $region51: #{actor_forward.1} parent=47 // pred_region
        %s749 = smul.u32 4, %s18
      $region52: #{actor_forward.1} parent=47 // pred_fallthru
        _
    $region48: #{actor_forward.1} parent=5 // pred_fallthru
      _
    %p750 = scmp.le.s32.totalorder 2, %s13
    // Predicated region
    $region53: #{actor_forward.1} parent=5 // pred_check
      %p751 = pneg %p750
    $region54: #{actor_forward.1} parent=5 // pred_check_branch
      %753 = sbr.rel (%p751) target = $region56
    $region55: #{actor_forward.1} parent=5 // pred_region
      %s754 = ssub.s32 %s13, 2
      // Predicated region
      $region57: #{actor_forward.1} parent=55 // pred_check
        %p755 = pneg %p194
      $region58: #{actor_forward.1} parent=55 // pred_check_branch
        %757 = sbr.rel (%p755) target = $region60
      $region59: #{actor_forward.1} parent=55 // pred_region
        %s758 = smul.u32 4, %s19
        %p759 = scmp.lt.s32.totalorder %s758, 7
        %s760 = scalar_select %p759, %s758, 7
        %s761 = smul.addr %s760, 8
        %s762 = scalar_lea.vmem %s7, %s761
      $region60: #{actor_forward.1} parent=55 // pred_fallthru
        _
    $region56: #{actor_forward.1} parent=5 // pred_fallthru
      _
  $region6: #{actor_forward.1} parent=0 // loop_footer
    %s17 = sadd.s32 1, %s13
  $region7: #{actor_forward.1} parent=0 // loop_footer_branch
    %12 = sbr.rel target = $region3
  $region8: #{actor_forward.1} parent=0 // loop_exit
    _

</llo_original>
